<compile_context>
chip_gen: v7x
topology: tpu7x:2x2x1
jax: 0.10.0
libtpu: 0.0.40
codegen_flags: <defaults>
</compile_context>

<pallas_src>
import functools

import jax
import jax.numpy as jnp
from jax.experimental import pallas as pl
from jax.experimental.pallas import tpu as pltpu

LN_EPS = 1e-5


def _round_up(x, m):
    return (x + m - 1) // m * m


def rnn_update_kernel(h_ref, x_ref, wh_ref, wx_ref, b_ref, gamma_ref, beta_ref,
                      o_ref, *, hidden, hidden_pad):
    """One batch tile of GRUCell + LayerNorm.

    h_ref:     [bm, H]        hidden state (original dtype)
    x_ref:     [bm, D]        input/update (original dtype)
    wh_ref:    [H, 4*Hp]      packed hidden weights (r | z | 0 | h_n slabs)
    wx_ref:    [D, 4*Hp]      packed input weights  (r | z | i_n | 0 slabs)
    b_ref:     [1, 4*Hp]      packed biases (r/z slabs hold b_ih + b_hh)
    gamma/beta:[1, H]         LayerNorm affine
    o_ref:     [bm, H]
    """
    H, Hp = hidden, hidden_pad
    mxu_dtype = wh_ref.dtype

    h = h_ref[...]                                           # [bm, H]
    x = x_ref[...]                                           # [bm, D]

    # Two accumulating MXU matmuls -> all four gate slabs, f32 accumulation.
    g = (jnp.dot(h.astype(mxu_dtype), wh_ref[...],
                 preferred_element_type=jnp.float32)
         + jnp.dot(x.astype(mxu_dtype), wx_ref[...],
                   preferred_element_type=jnp.float32)
         + b_ref[...])                                       # [bm, 4*Hp]

    # r|z is one contiguous lane-aligned slab -> a single sigmoid.
    rz = jax.nn.sigmoid(g[:, 0:2 * Hp])
    r = rz[:, 0:Hp]
    z = rz[:, Hp:2 * Hp]
    n = jnp.tanh(g[:, 2 * Hp:3 * Hp] + r * g[:, 3 * Hp:4 * Hp])

    # (1 - z) * n + z * h  ==  n + z * (h - n), with full-precision h.
    n_h = n[:, 0:H]
    h_new = n_h + z[:, 0:H] * (h.astype(jnp.float32) - n_h)  # [bm, H]

    # One-pass LayerNorm over the real H features (no masking needed).
    inv_h = 1.0 / H
    s1 = jnp.sum(h_new, axis=-1, keepdims=True)
    s2 = jnp.sum(h_new * h_new, axis=-1, keepdims=True)
    mean = s1 * inv_h
    var = jnp.maximum(s2 * inv_h - mean * mean, 0.0)
    y = (h_new - mean) * jax.lax.rsqrt(var + LN_EPS)
    o_ref[...] = (y * gamma_ref[...] + beta_ref[...]).astype(o_ref.dtype)


def _pack_params(params, H, Hp, mxu_dtype):
    """Pack GRU weights/biases into lane-aligned gate slabs of width Hp."""
    D = params["w_ih"].shape[1]

    def pad_cols(a):                       # [rows, H] -> [rows, Hp]
        return jnp.pad(a.astype(jnp.float32), ((0, 0), (0, Hp - a.shape[1])))

    def pad_vec(v):                        # [H] -> [Hp]
        return jnp.pad(v.astype(jnp.float32), (0, Hp - v.shape[0]))

    w_hh_t = params["w_hh"].T              # [H, 3H]  (r | z | n)
    w_ih_t = params["w_ih"].T              # [D, 3H]

    wh = jnp.concatenate(
        [pad_cols(w_hh_t[:, 0:H]),          # r   <- W_hr
         pad_cols(w_hh_t[:, H:2 * H]),      # z   <- W_hz
         jnp.zeros((H, Hp), jnp.float32),   # i_n (input-only slab)
         pad_cols(w_hh_t[:, 2 * H:])],      # h_n <- W_hn
        axis=1).astype(mxu_dtype)

    wx = jnp.concatenate(
        [pad_cols(w_ih_t[:, 0:H]),          # r   <- W_ir
         pad_cols(w_ih_t[:, H:2 * H]),      # z   <- W_iz
         pad_cols(w_ih_t[:, 2 * H:]),       # i_n <- W_in
         jnp.zeros((D, Hp), jnp.float32)],  # h_n (hidden-only slab)
        axis=1).astype(mxu_dtype)

    b_ih, b_hh = params["b_ih"], params["b_hh"]
    b = jnp.concatenate(
        [pad_vec(b_ih[0:H] + b_hh[0:H]),            # combined r bias
         pad_vec(b_ih[H:2 * H] + b_hh[H:2 * H]),    # combined z bias
         pad_vec(b_ih[2 * H:]),                     # i_n bias
         pad_vec(b_hh[2 * H:])],                    # h_n bias
        axis=0)[None, :]                            # [1, 4*Hp]

    gamma = params["ln_gamma"].astype(jnp.float32)[None, :]
    beta = params["ln_beta"].astype(jnp.float32)[None, :]
    return wh, wx, b, gamma, beta


def rnn_update(feat, update, params, *, block_m=None, use_bf16=True):
    """feat: [N, H] hidden state; update: [N, D] input. Returns [N, H]."""
    N, D = update.shape
    H = feat.shape[-1]
    assert feat.shape[0] == N

    Hp = _round_up(H, 128)                      # lane-aligned gate slab width
    mxu_dtype = jnp.bfloat16 if use_bf16 else jnp.float32
    w_bytes = jnp.dtype(mxu_dtype).itemsize
    act_bytes = jnp.dtype(feat.dtype).itemsize
    out_dtype = feat.dtype
    out_bytes = jnp.dtype(out_dtype).itemsize

    if block_m is None:
        # Small hidden dims: bigger tiles amortize the ~0.35us/step pipeline
        # overhead (v5e/v6e); the VMEM budget below shrinks the tile again
        # wherever it would not fit (v7x / large H).
        block_m = 1024 if Hp <= 256 else 512

    # Balanced batch tiles; keep >= 2 (ideally 4) grid steps so the "parallel"
    # axis can shard across v7x's two TensorCores and DMA overlaps compute,
    # without creating tiles smaller than 16 rows.
    n_tiles = max(pl.cdiv(N, block_m),
                  min(4, pl.cdiv(N, 128)),
                  min(2, pl.cdiv(N, 16)))
    bm = _round_up(pl.cdiv(N, n_tiles), 16)

    def vmem_bytes(bm_):
        gw = 4 * Hp
        lh, ld = _round_up(H, 128), _round_up(D, 128)        # lane padding
        by = 2 * bm_ * (lh + ld) * act_bytes                 # feat/update, dbuf
        by += (_round_up(H, 8) + _round_up(D, 8)) * gw * w_bytes  # W (single-buf)
        by += 8 * (gw + 2 * lh) * 4                          # bias/gamma/beta
        by += 2 * bm_ * lh * out_bytes                       # output, dbuf
        by += bm_ * gw * 4                                    # g intermediate
        by += 4 * bm_ * Hp * 4 + 4 * bm_ * lh * 4             # gate/LN temps
        return by

    VMEM_BUDGET = 32 * 1024 * 1024          # leaves headroom inside v7x 64 MiB
    while bm > 16 and vmem_bytes(bm) > VMEM_BUDGET:
        bm = max(16, _round_up(bm // 2, 16))
    grid_m = pl.cdiv(N, bm)

    # Explicit scoped-VMEM limit from the buffer arithmetic (defaults are only
    # 16/32 MiB); never below the platform defaults, never above a v7x-safe cap.
    vmem_limit = min(max(_round_up(int(vmem_bytes(bm) * 1.4), 1 << 20),
                         32 * 1024 * 1024),
                     48 * 1024 * 1024)

    wh, wx, b, gamma, beta = _pack_params(params, H, Hp, mxu_dtype)
    kernel = functools.partial(rnn_update_kernel, hidden=H, hidden_pad=Hp)

    flops = 2 * N * (H + D) * 4 * Hp + 12 * N * Hp
    transcendentals = 3 * N * Hp + 2 * N
    bytes_accessed = (N * (H + D) * act_bytes
                      + (H + D) * 4 * Hp * w_bytes
                      + (4 * Hp + 2 * H) * 4
                      + N * H * out_bytes)

    invariant = lambda i: (0, 0)            # noqa: E731  (grid-invariant operands)

    out = pl.pallas_call(
        kernel,
        out_shape=jax.ShapeDtypeStruct((N, H), out_dtype),
        grid_spec=pltpu.PrefetchScalarGridSpec(
            num_scalar_prefetch=0,
            grid=(grid_m,),
            in_specs=[
                pl.BlockSpec((bm, H), lambda i: (i, 0)),              # feat (h)
                pl.BlockSpec((bm, D), lambda i: (i, 0)),              # update (x)
                pl.BlockSpec((H, 4 * Hp), invariant,
                             pipeline_mode=pl.Buffered(1)),           # Wh
                pl.BlockSpec((D, 4 * Hp), invariant,
                             pipeline_mode=pl.Buffered(1)),           # Wx
                pl.BlockSpec((1, 4 * Hp), invariant,
                             pipeline_mode=pl.Buffered(1)),           # bias
                pl.BlockSpec((1, H), invariant,
                             pipeline_mode=pl.Buffered(1)),           # ln gamma
                pl.BlockSpec((1, H), invariant,
                             pipeline_mode=pl.Buffered(1)),           # ln beta
            ],
            out_specs=pl.BlockSpec((bm, H), lambda i: (i, 0)),
        ),
        compiler_params=pltpu.CompilerParams(
            dimension_semantics=("parallel",),
            vmem_limit_bytes=vmem_limit),
        cost_estimate=pl.CostEstimate(
            flops=flops,
            transcendentals=transcendentals,
            bytes_accessed=bytes_accessed),
    )(feat, update, wh, wx, b, gamma, beta)

    return out


def init_params(key, in_dim, out_dim):
    """Deterministic init matching torch.nn.GRUCell / LayerNorm shapes."""
    k1, k2, k3, k4 = jax.random.split(key, 4)
    bound = 1.0 / jnp.sqrt(out_dim)
    return {
        "w_ih": jax.random.uniform(k1, (3 * out_dim, in_dim), jnp.float32, -bound, bound),
        "w_hh": jax.random.uniform(k2, (3 * out_dim, out_dim), jnp.float32, -bound, bound),
        "b_ih": jax.random.uniform(k3, (3 * out_dim,), jnp.float32, -bound, bound),
        "b_hh": jax.random.uniform(k4, (3 * out_dim,), jnp.float32, -bound, bound),
        "ln_gamma": jnp.ones((out_dim,), jnp.float32),
        "ln_beta": jnp.zeros((out_dim,), jnp.float32),
    }


def rnn_update_ref(feat, update, params):
    """Pure-JAX reference of the PyTorch forward (eval-mode dropout)."""
    x, h = update, feat
    gi = x @ params["w_ih"].T + params["b_ih"]
    gh = h @ params["w_hh"].T + params["b_hh"]
    H = h.shape[-1]
    r = jax.nn.sigmoid(gi[:, :H] + gh[:, :H])
    z = jax.nn.sigmoid(gi[:, H:2 * H] + gh[:, H:2 * H])
    n = jnp.tanh(gi[:, 2 * H:] + r * gh[:, 2 * H:])
    h_new = (1.0 - z) * n + z * h
    mean = jnp.mean(h_new, axis=-1, keepdims=True)
    var = jnp.mean((h_new - mean) ** 2, axis=-1, keepdims=True)
    y = (h_new - mean) / jnp.sqrt(var + LN_EPS)
    return y * params["ln_gamma"] + params["ln_beta"]


if __name__ == "__main__":
    # Small shapes; N deliberately not a multiple of the 16-row tile so the
    # ragged tail block (masked reads / dropped OOB writes) is exercised.
    N, in_dim, out_dim = 20, 48, 32

    key = jax.random.PRNGKey(0)
    k_feat, k_upd, k_params = jax.random.split(key, 3)
    feat = jax.random.normal(k_feat, (N, out_dim), jnp.float32)
    update = jax.random.normal(k_upd, (N, in_dim), jnp.float32)
    params = init_params(k_params, in_dim, out_dim)

    ref = rnn_update_ref(feat, update, params)

    # f32 path: tight check of the packed/padded formulation.
    out_f32 = jax.block_until_ready(rnn_update(feat, update, params, use_bf16=False))
    assert out_f32.shape == (N, out_dim)
    err_f32 = float(jnp.max(jnp.abs(out_f32 - ref)))
    assert jnp.allclose(out_f32, ref, atol=5e-4, rtol=1e-4), err_f32

    # bf16-MXU path (default): looser tolerance due to bf16 matmul inputs.
    out_bf16 = jax.block_until_ready(rnn_update(feat, update, params, use_bf16=True))
    assert out_bf16.shape == (N, out_dim)
    err_bf16 = float(jnp.max(jnp.abs(out_bf16 - ref)))
    assert jnp.allclose(out_bf16, ref, atol=5e-2, rtol=5e-2), err_bf16

    print("KERNEL_OK")
</pallas_src>

<mosaic_0001>
module attributes {stable_mosaic.version = 11 : i64} {
  func.func @rnn_update_kernel(%arg0: i32, %arg1: memref<16x32xf32, #tpu.memory_space<vmem>>, %arg2: memref<16x48xf32, #tpu.memory_space<vmem>>, %arg3: memref<32x512xf32, #tpu.memory_space<vmem>>, %arg4: memref<48x512xf32, #tpu.memory_space<vmem>>, %arg5: memref<1x512xf32, #tpu.memory_space<vmem>>, %arg6: memref<1x32xf32, #tpu.memory_space<vmem>>, %arg7: memref<1x32xf32, #tpu.memory_space<vmem>>, %arg8: memref<16x32xf32, #tpu.memory_space<vmem>>) attributes {dimension_semantics = [#tpu.dimension_semantics<parallel>], iteration_bounds = array<i64: 2>, scalar_prefetch = 0 : i64, scratch_operands = 0 : i64, tpu.core_type = #tpu.core_type<tc>, window_params = [{transform_indices = @transform_0, window_bounds = array<i64: 16, 32>}, {transform_indices = @transform_1, window_bounds = array<i64: 16, 48>}, {pipeline_mode = #tpu.pipeline_mode<synchronous>, transform_indices = @transform_2, window_bounds = array<i64: 32, 512>}, {pipeline_mode = #tpu.pipeline_mode<synchronous>, transform_indices = @transform_3, window_bounds = array<i64: 48, 512>}, {pipeline_mode = #tpu.pipeline_mode<synchronous>, transform_indices = @transform_4, window_bounds = array<i64: 1, 512>}, {pipeline_mode = #tpu.pipeline_mode<synchronous>, transform_indices = @transform_5, window_bounds = array<i64: 1, 32>}, {pipeline_mode = #tpu.pipeline_mode<synchronous>, transform_indices = @transform_6, window_bounds = array<i64: 1, 32>}, {transform_indices = @transform_7, window_bounds = array<i64: 16, 32>}]} {
    %c0 = arith.constant 0 : index
    %c0_0 = arith.constant 0 : index
    %0 = vector.load %arg1[%c0, %c0_0] : memref<16x32xf32, #tpu.memory_space<vmem>>, vector<16x32xf32>
    %c0_1 = arith.constant 0 : index
    %c0_2 = arith.constant 0 : index
    %1 = vector.load %arg2[%c0_1, %c0_2] : memref<16x48xf32, #tpu.memory_space<vmem>>, vector<16x48xf32>
    %c0_3 = arith.constant 0 : index
    %c0_4 = arith.constant 0 : index
    %2 = vector.load %arg3[%c0_3, %c0_4] : memref<32x512xf32, #tpu.memory_space<vmem>>, vector<32x512xf32>
    %cst = arith.constant dense<0.000000e+00> : vector<16x512xf32>
    %3 = tpu.matmul %0, %2, %cst {dimension_numbers = #tpu.dot_dimension_numbers<[1], [0], [0], [1], [0, 0, 1, 1], [], []>} : vector<16x32xf32>, vector<32x512xf32>, vector<16x512xf32> -> vector<16x512xf32>
    %c0_5 = arith.constant 0 : index
    %c0_6 = arith.constant 0 : index
    %4 = vector.load %arg4[%c0_5, %c0_6] : memref<48x512xf32, #tpu.memory_space<vmem>>, vector<48x512xf32>
    %cst_7 = arith.constant dense<0.000000e+00> : vector<16x512xf32>
    %5 = tpu.matmul %1, %4, %cst_7 {dimension_numbers = #tpu.dot_dimension_numbers<[1], [0], [0], [1], [0, 0, 1, 1], [], []>} : vector<16x48xf32>, vector<48x512xf32>, vector<16x512xf32> -> vector<16x512xf32>
    %6 = arith.addf %3, %5 : vector<16x512xf32>
    %c0_8 = arith.constant 0 : index
    %c0_9 = arith.constant 0 : index
    %7 = vector.load %arg5[%c0_8, %c0_9] : memref<1x512xf32, #tpu.memory_space<vmem>>, vector<1x512xf32>
    %8 = vector.broadcast %7 : vector<1x512xf32> to vector<16x512xf32>
    %9 = arith.addf %6, %8 : vector<16x512xf32>
    %10 = vector.extract_strided_slice %9 {offsets = [0, 0], sizes = [16, 256], strides = [1, 1]} : vector<16x512xf32> to vector<16x256xf32>
    %11 = arith.negf %10 : vector<16x256xf32>
    %12 = math.exp %11 : vector<16x256xf32>
    %cst_10 = arith.constant 1.000000e+00 : f32
    %13 = vector.broadcast %cst_10 : f32 to vector<16x256xf32>
    %14 = arith.addf %13, %12 : vector<16x256xf32>
    %15 = arith.divf %13, %14 : vector<16x256xf32>
    %16 = vector.extract_strided_slice %15 {offsets = [0, 0], sizes = [16, 128], strides = [1, 1]} : vector<16x256xf32> to vector<16x128xf32>
    %17 = vector.extract_strided_slice %15 {offsets = [0, 128], sizes = [16, 128], strides = [1, 1]} : vector<16x256xf32> to vector<16x128xf32>
    %18 = vector.extract_strided_slice %9 {offsets = [0, 256], sizes = [16, 128], strides = [1, 1]} : vector<16x512xf32> to vector<16x128xf32>
    %19 = vector.extract_strided_slice %9 {offsets = [0, 384], sizes = [16, 128], strides = [1, 1]} : vector<16x512xf32> to vector<16x128xf32>
    %20 = arith.mulf %16, %19 : vector<16x128xf32>
    %21 = arith.addf %18, %20 : vector<16x128xf32>
    %22 = math.tanh %21 : vector<16x128xf32>
    %23 = vector.extract_strided_slice %22 {offsets = [0, 0], sizes = [16, 32], strides = [1, 1]} : vector<16x128xf32> to vector<16x32xf32>
    %24 = vector.extract_strided_slice %17 {offsets = [0, 0], sizes = [16, 32], strides = [1, 1]} : vector<16x128xf32> to vector<16x32xf32>
    %25 = arith.subf %0, %23 : vector<16x32xf32>
    %26 = arith.mulf %24, %25 : vector<16x32xf32>
    %27 = arith.addf %23, %26 : vector<16x32xf32>
    %cst_11 = arith.constant dense<0.000000e+00> : vector<16xf32>
    %28 = vector.multi_reduction <add>, %27, %cst_11 [1] : vector<16x32xf32> to vector<16xf32>
    %29 = vector.shape_cast %28 : vector<16xf32> to vector<16x1xf32>
    %30 = arith.mulf %27, %27 : vector<16x32xf32>
    %cst_12 = arith.constant dense<0.000000e+00> : vector<16xf32>
    %31 = vector.multi_reduction <add>, %30, %cst_12 [1] : vector<16x32xf32> to vector<16xf32>
    %32 = vector.shape_cast %31 : vector<16xf32> to vector<16x1xf32>
    %cst_13 = arith.constant 3.125000e-02 : f32
    %33 = vector.broadcast %cst_13 : f32 to vector<16x1xf32>
    %34 = arith.mulf %29, %33 : vector<16x1xf32>
    %cst_14 = arith.constant 3.125000e-02 : f32
    %35 = vector.broadcast %cst_14 : f32 to vector<16x1xf32>
    %36 = arith.mulf %32, %35 : vector<16x1xf32>
    %37 = arith.mulf %34, %34 : vector<16x1xf32>
    %38 = arith.subf %36, %37 : vector<16x1xf32>
    %cst_15 = arith.constant 0.000000e+00 : f32
    %39 = vector.broadcast %cst_15 : f32 to vector<16x1xf32>
    %40 = arith.maximumf %38, %39 : vector<16x1xf32>
    %41 = vector.broadcast %34 : vector<16x1xf32> to vector<16x32xf32>
    %42 = arith.subf %27, %41 : vector<16x32xf32>
    %cst_16 = arith.constant 9.99999974E-6 : f32
    %43 = vector.broadcast %cst_16 : f32 to vector<16x1xf32>
    %44 = arith.addf %40, %43 : vector<16x1xf32>
    %45 = math.rsqrt %44 : vector<16x1xf32>
    %46 = vector.broadcast %45 : vector<16x1xf32> to vector<16x32xf32>
    %47 = arith.mulf %42, %46 : vector<16x32xf32>
    %c0_17 = arith.constant 0 : index
    %c0_18 = arith.constant 0 : index
    %48 = vector.load %arg6[%c0_17, %c0_18] : memref<1x32xf32, #tpu.memory_space<vmem>>, vector<1x32xf32>
    %49 = vector.broadcast %48 : vector<1x32xf32> to vector<16x32xf32>
    %50 = arith.mulf %47, %49 : vector<16x32xf32>
    %c0_19 = arith.constant 0 : index
    %c0_20 = arith.constant 0 : index
    %51 = vector.load %arg7[%c0_19, %c0_20] : memref<1x32xf32, #tpu.memory_space<vmem>>, vector<1x32xf32>
    %52 = vector.broadcast %51 : vector<1x32xf32> to vector<16x32xf32>
    %53 = arith.addf %50, %52 : vector<16x32xf32>
    %c0_21 = arith.constant 0 : index
    %c0_22 = arith.constant 0 : index
    %54 = vector.load %arg8[%c0_21, %c0_22] : memref<16x32xf32, #tpu.memory_space<vmem>>, vector<16x32xf32>
    tpu.vector_store %arg8[%c0_21, %c0_22], %53 {strides = array<i32>} : memref<16x32xf32, #tpu.memory_space<vmem>>, vector<16x32xf32>,
    return
  }
  func.func @transform_0(%arg0: i32) -> (i32, i32) {
    %c0_i32 = arith.constant 0 : i32
    %c0_i32_0 = arith.constant 0 : i32
    return %arg0, %c0_i32 : i32, i32
  }
  func.func @transform_1(%arg0: i32) -> (i32, i32) {
    %c0_i32 = arith.constant 0 : i32
    %c0_i32_0 = arith.constant 0 : i32
    return %arg0, %c0_i32 : i32, i32
  }
  func.func @transform_2(%arg0: i32) -> (i32, i32) {
    %c0_i32 = arith.constant 0 : i32
    %c0_i32_0 = arith.constant 0 : i32
    %c0_i32_1 = arith.constant 0 : i32
    return %c0_i32, %c0_i32_0 : i32, i32
  }
  func.func @transform_3(%arg0: i32) -> (i32, i32) {
    %c0_i32 = arith.constant 0 : i32
    %c0_i32_0 = arith.constant 0 : i32
    %c0_i32_1 = arith.constant 0 : i32
    return %c0_i32, %c0_i32_0 : i32, i32
  }
  func.func @transform_4(%arg0: i32) -> (i32, i32) {
    %c0_i32 = arith.constant 0 : i32
    %c0_i32_0 = arith.constant 0 : i32
    %c0_i32_1 = arith.constant 0 : i32
    return %c0_i32, %c0_i32_0 : i32, i32
  }
  func.func @transform_5(%arg0: i32) -> (i32, i32) {
    %c0_i32 = arith.constant 0 : i32
    %c0_i32_0 = arith.constant 0 : i32
    %c0_i32_1 = arith.constant 0 : i32
    return %c0_i32, %c0_i32_0 : i32, i32
  }
  func.func @transform_6(%arg0: i32) -> (i32, i32) {
    %c0_i32 = arith.constant 0 : i32
    %c0_i32_0 = arith.constant 0 : i32
    %c0_i32_1 = arith.constant 0 : i32
    return %c0_i32, %c0_i32_0 : i32, i32
  }
  func.func @transform_7(%arg0: i32) -> (i32, i32) {
    %c0_i32 = arith.constant 0 : i32
    %c0_i32_0 = arith.constant 0 : i32
    return %arg0, %c0_i32 : i32, i32
  }
}

</mosaic_0001>

<llo_original>
// kernel: tpu_custom_call.1
$region0: #{tpu_custom_call.1}
  #allocation0 [shape = 'u32[]', space=smem, size = 0x4, offset = 0x4, fixed_abs, tag = 'smem constant byte address 0x4 - core index']
  #allocation1 [shape = 'u32[144,128]{1,0:T(1,128)}', space=vmem, size = 0x12000, scoped, tag = 'internal scratch']
  %s0 = inlined_call_operand.hbm [shape: f32[20,32], index: 0, kind: input, shape index: {}]
  %s1 = inlined_call_operand.hbm [shape: f32[20,48], index: 1, kind: input, shape index: {}]
  %s2 = inlined_call_operand.hbm [shape: f32[32,512], index: 2, kind: input, shape index: {}]
  %s3 = inlined_call_operand.hbm [shape: f32[48,512], index: 3, kind: input, shape index: {}]
  %s4 = inlined_call_operand.vmem [shape: f32[1,512], index: 4, kind: input, shape index: {}]
  %s5 = inlined_call_operand.vmem [shape: f32[1,32], index: 5, kind: input, shape index: {}]
  %s6 = inlined_call_operand.vmem [shape: f32[1,32], index: 6, kind: input, shape index: {}]
  %s7 = inlined_call_operand.hbm [shape: f32[20,32], index: 7, kind: output, shape index: {}]
  %s8 = sld [smem:[#allocation0]]
  $region77: #{tpu_custom_call.1} parent=0
    _
  %s10 = ssub.s32 1, %s8
  %s11 = scalar_select 0, %s10, %s8
  $region1: #{tpu_custom_call.1} parent=0
    #allocation2 [shape = 'u8[16384]{0}', space=vmem, size = 0x4000, scoped, tag = 'input window, operand 0']
    #allocation3 [shape = 's32[2]{0}', space=sflag, size = 0x8, scoped, tag = 'scoped memory for tpu_custom_call.1']
    #allocation4 [shape = 's32[2]{0}', space=sflag, size = 0x8, scoped, tag = 'scoped memory for tpu_custom_call.1']
    #allocation5 [shape = 'u8[16384]{0}', space=vmem, size = 0x4000, scoped, tag = 'input window, operand 1']
    #allocation6 [shape = 's32[2]{0}', space=sflag, size = 0x8, scoped, tag = 'scoped memory for tpu_custom_call.1']
    #allocation7 [shape = 'u8[65536]{0}', space=vmem, size = 0x10000, scoped, tag = 'input window, operand 2, single buffered']
    #allocation8 [shape = 'u8[98304]{0}', space=vmem, size = 0x18000, scoped, tag = 'input window, operand 3, single buffered']
    #allocation9 [shape = 's32[1]{0}', space=sflag, size = 0x4, scoped, tag = 'scoped memory for tpu_custom_call.1']
    #allocation10 [shape = 'u8[16384]{0}', space=vmem, size = 0x4000, scoped, tag = 'output window, operand 0']
    %12 = vsyncpa [#allocation3], 0
    %s13 = scalar_lea.sflag [#allocation3], 1
    %14 = vsyncpa %s13, 0
    %15 = vsyncpa [#allocation6], 0
    %s16 = scalar_lea.sflag [#allocation6], 1
    %17 = vsyncpa %s16, 0
    %18 = vsyncpa [#allocation9], 0
    %19 = vsyncpa [#allocation4], 0
    %s20 = scalar_lea.sflag [#allocation4], 1
    %21 = vsyncpa %s20, 0
    loop: start=0, step=1, limit=4
    $region2: #{tpu_custom_call.1} parent=1 // loop_pre_header
      _
    $region3: #{tpu_custom_call.1} parent=1 // loop_header
      %s23 = sphi 0, %s27
      %p24 = scmp.ge.s32.totalorder %s23, 4
      %s33 = sphi 0, %s35
      %s36 = sphi 0, %s33
      %s37 = sphi 0, %s36
      %s53 = sphi 0, %s37
      %s59 = sphi 0, %s61
      %s62 = sphi 0, %s59
      %s63 = sphi 0, %s62
      %s79 = sphi 0, %s63
      %s83 = sphi 0, %s83
      %s85 = sphi 0, %s83
      %s86 = sphi 0, %s85
      %s100 = sphi 0, %s86
      %s104 = sphi 0, %s104
      %s106 = sphi 0, %s104
      %s107 = sphi 0, %s106
      %s121 = sphi 0, %s107
      %s125 = sphi 0, %s125
      %s127 = sphi 0, %s125
      %s128 = sphi 0, %s127
      %s142 = sphi 0, %s128
      %s146 = sphi 0, %s146
      %s148 = sphi 0, %s146
      %s149 = sphi 0, %s148
      %s163 = sphi 0, %s149
      %s167 = sphi 0, %s167
      %s169 = sphi 0, %s167
      %s170 = sphi 0, %s169
      %s184 = sphi 0, %s170
      %s190 = sphi 0, %s192
      %s193 = sphi 0, %s190
      %s194 = sphi 0, %s193
      %s210 = sphi 0, %s194
    $region4: #{tpu_custom_call.1} parent=1 // loop_header_branch
      %26 = sbr.rel (%p24) target = $region8
    $region5: #{tpu_custom_call.1} parent=1 // loop_body
      %s28 = ssub.s32 %s23, 1
      %s29 = ssub.s32 %s23, 2
      %s30 = sadd.s32 %s23, 1
      %s31 = ssub.s32 %s23, %s30
      %p32 = scmp.eq.s32.totalorder %s31, 0
      %s34 = sadd.s32 %s33, 1
      %s35 = scalar_select %p32, %s33, %s34
      %p38 = pneg %p32
      %p39 = scmp.eq.s32.totalorder %s23, 1
      %p40 = por %p38, %p39
      %p41 = scmp.ne.s32.totalorder %s33, %s36
      %p42 = scmp.eq.s32.totalorder %s23, 0
      %p43 = por %p41, %p42
      %p44 = scmp.ne.s32.totalorder %s33, %s36
      %p45 = scmp.eq.s32.totalorder %s28, 1
      %p46 = por %p44, %p45
      %p47 = scmp.ne.s32.totalorder %s36, %s37
      %p48 = scmp.eq.s32.totalorder %s28, 0
      %p49 = por %p47, %p48
      %p50 = scmp.ne.s32.totalorder %s36, %s37
      %p51 = scmp.eq.s32.totalorder %s29, 1
      %p52 = por %p50, %p51
      %p54 = scmp.ne.s32.totalorder %s37, %s53
      %p55 = scmp.eq.s32.totalorder %s29, 0
      %p56 = por %p54, %p55
      %s57 = ssub.s32 %s23, %s30
      %p58 = scmp.eq.s32.totalorder %s57, 0
      %s60 = sadd.s32 %s59, 1
      %s61 = scalar_select %p58, %s59, %s60
      %p64 = pneg %p58
      %p65 = scmp.eq.s32.totalorder %s23, 1
      %p66 = por %p64, %p65
      %p67 = scmp.ne.s32.totalorder %s59, %s62
      %p68 = scmp.eq.s32.totalorder %s23, 0
      %p69 = por %p67, %p68
      %p70 = scmp.ne.s32.totalorder %s59, %s62
      %p71 = scmp.eq.s32.totalorder %s28, 1
      %p72 = por %p70, %p71
      %p73 = scmp.ne.s32.totalorder %s62, %s63
      %p74 = scmp.eq.s32.totalorder %s28, 0
      %p75 = por %p73, %p74
      %p76 = scmp.ne.s32.totalorder %s62, %s63
      %p77 = scmp.eq.s32.totalorder %s29, 1
      %p78 = por %p76, %p77
      %p80 = scmp.ne.s32.totalorder %s63, %s79
      %p81 = scmp.eq.s32.totalorder %s29, 0
      %p82 = por %p80, %p81
      %s84 = sadd.s32 %s83, 1
      %p87 = scmp.eq.s32.totalorder %s23, 1
      %p88 = scmp.ne.s32.totalorder %s83, %s85
      %p89 = scmp.eq.s32.totalorder %s23, 0
      %p90 = por %p88, %p89
      %p91 = scmp.ne.s32.totalorder %s83, %s85
      %p92 = scmp.eq.s32.totalorder %s28, 1
      %p93 = por %p91, %p92
      %p94 = scmp.ne.s32.totalorder %s85, %s86
      %p95 = scmp.eq.s32.totalorder %s28, 0
      %p96 = por %p94, %p95
      %p97 = scmp.ne.s32.totalorder %s85, %s86
      %p98 = scmp.eq.s32.totalorder %s29, 1
      %p99 = por %p97, %p98
      %p101 = scmp.ne.s32.totalorder %s86, %s100
      %p102 = scmp.eq.s32.totalorder %s29, 0
      %p103 = por %p101, %p102
      %s105 = sadd.s32 %s104, 1
      %p108 = scmp.eq.s32.totalorder %s23, 1
      %p109 = scmp.ne.s32.totalorder %s104, %s106
      %p110 = scmp.eq.s32.totalorder %s23, 0
      %p111 = por %p109, %p110
      %p112 = scmp.ne.s32.totalorder %s104, %s106
      %p113 = scmp.eq.s32.totalorder %s28, 1
      %p114 = por %p112, %p113
      %p115 = scmp.ne.s32.totalorder %s106, %s107
      %p116 = scmp.eq.s32.totalorder %s28, 0
      %p117 = por %p115, %p116
      %p118 = scmp.ne.s32.totalorder %s106, %s107
      %p119 = scmp.eq.s32.totalorder %s29, 1
      %p120 = por %p118, %p119
      %p122 = scmp.ne.s32.totalorder %s107, %s121
      %p123 = scmp.eq.s32.totalorder %s29, 0
      %p124 = por %p122, %p123
      %s126 = sadd.s32 %s125, 1
      %p129 = scmp.eq.s32.totalorder %s23, 1
      %p130 = scmp.ne.s32.totalorder %s125, %s127
      %p131 = scmp.eq.s32.totalorder %s23, 0
      %p132 = por %p130, %p131
      %p133 = scmp.ne.s32.totalorder %s125, %s127
      %p134 = scmp.eq.s32.totalorder %s28, 1
      %p135 = por %p133, %p134
      %p136 = scmp.ne.s32.totalorder %s127, %s128
      %p137 = scmp.eq.s32.totalorder %s28, 0
      %p138 = por %p136, %p137
      %p139 = scmp.ne.s32.totalorder %s127, %s128
      %p140 = scmp.eq.s32.totalorder %s29, 1
      %p141 = por %p139, %p140
      %p143 = scmp.ne.s32.totalorder %s128, %s142
      %p144 = scmp.eq.s32.totalorder %s29, 0
      %p145 = por %p143, %p144
      %s147 = sadd.s32 %s146, 1
      %p150 = scmp.eq.s32.totalorder %s23, 1
      %p151 = scmp.ne.s32.totalorder %s146, %s148
      %p152 = scmp.eq.s32.totalorder %s23, 0
      %p153 = por %p151, %p152
      %p154 = scmp.ne.s32.totalorder %s146, %s148
      %p155 = scmp.eq.s32.totalorder %s28, 1
      %p156 = por %p154, %p155
      %p157 = scmp.ne.s32.totalorder %s148, %s149
      %p158 = scmp.eq.s32.totalorder %s28, 0
      %p159 = por %p157, %p158
      %p160 = scmp.ne.s32.totalorder %s148, %s149
      %p161 = scmp.eq.s32.totalorder %s29, 1
      %p162 = por %p160, %p161
      %p164 = scmp.ne.s32.totalorder %s149, %s163
      %p165 = scmp.eq.s32.totalorder %s29, 0
      %p166 = por %p164, %p165
      %s168 = sadd.s32 %s167, 1
      %p171 = scmp.eq.s32.totalorder %s23, 1
      %p172 = scmp.ne.s32.totalorder %s167, %s169
      %p173 = scmp.eq.s32.totalorder %s23, 0
      %p174 = por %p172, %p173
      %p175 = scmp.ne.s32.totalorder %s167, %s169
      %p176 = scmp.eq.s32.totalorder %s28, 1
      %p177 = por %p175, %p176
      %p178 = scmp.ne.s32.totalorder %s169, %s170
      %p179 = scmp.eq.s32.totalorder %s28, 0
      %p180 = por %p178, %p179
      %p181 = scmp.ne.s32.totalorder %s169, %s170
      %p182 = scmp.eq.s32.totalorder %s29, 1
      %p183 = por %p181, %p182
      %p185 = scmp.ne.s32.totalorder %s170, %s184
      %p186 = scmp.eq.s32.totalorder %s29, 0
      %p187 = por %p185, %p186
      %s188 = ssub.s32 %s23, %s30
      %p189 = scmp.eq.s32.totalorder %s188, 0
      %s191 = sadd.s32 %s190, 1
      %s192 = scalar_select %p189, %s190, %s191
      %p195 = pneg %p189
      %p196 = scmp.eq.s32.totalorder %s23, 1
      %p197 = por %p195, %p196
      %p198 = scmp.ne.s32.totalorder %s190, %s193
      %p199 = scmp.eq.s32.totalorder %s23, 0
      %p200 = por %p198, %p199
      %p201 = scmp.ne.s32.totalorder %s190, %s193
      %p202 = scmp.eq.s32.totalorder %s28, 1
      %p203 = por %p201, %p202
      %p204 = scmp.ne.s32.totalorder %s193, %s194
      %p205 = scmp.eq.s32.totalorder %s28, 0
      %p206 = por %p204, %p205
      %p207 = scmp.ne.s32.totalorder %s193, %s194
      %p208 = scmp.eq.s32.totalorder %s29, 1
      %p209 = por %p207, %p208
      %p211 = scmp.ne.s32.totalorder %s194, %s210
      %p212 = scmp.eq.s32.totalorder %s29, 0
      %p213 = por %p211, %p212
      %p214 = scmp.le.s32.totalorder 1, %s23
      %p215 = scmp.lt.s32.totalorder %s23, 3
      %p216 = pnand %p214, %p215
      %p217 = pneg %p216
      // Predicated region
      $region9: #{tpu_custom_call.1} parent=5 // pred_check
        _
      $region10: #{tpu_custom_call.1} parent=5 // pred_check_branch
        %219 = sbr.rel (%p216) target = $region12
      $region11: #{tpu_custom_call.1} parent=5 // pred_region
        %s220 = ssub.s32 %s23, 1
        // Predicated region
        $region13: #{tpu_custom_call.1} parent=11 // pred_check
          %p221 = pneg %p96
        $region14: #{tpu_custom_call.1} parent=11 // pred_check_branch
          %223 = sbr.rel (%p221) target = $region16
        $region15: #{tpu_custom_call.1} parent=11 // pred_region
          %s225 = ssub.s32 2048, 2048
          %226 = vsyncadd [#allocation6], %s225
          %s227 = sshll.u32 [#allocation7], 4
          %s228 = int_to_ptr.vmem [resolvable:$true] %s227
          %233 = dma.hbm_to_vmem [thread:$0]  %s2, 2048, %s228, [#allocation6], 512, 512, 32
        $region16: #{tpu_custom_call.1} parent=11 // pred_fallthru
          _
        // Predicated region
        $region17: #{tpu_custom_call.1} parent=11 // pred_check
          %p234 = pneg %p117
        $region18: #{tpu_custom_call.1} parent=11 // pred_check_branch
          %236 = sbr.rel (%p234) target = $region20
        $region19: #{tpu_custom_call.1} parent=11 // pred_region
          %s238 = ssub.s32 3072, 3072
          %239 = vsyncadd [#allocation9], %s238
          %s240 = sshll.u32 [#allocation8], 4
          %s241 = int_to_ptr.vmem [resolvable:$true] %s240
          %246 = dma.hbm_to_vmem [thread:$0]  %s3, 3072, %s241, [#allocation9], 512, 512, 32
        $region20: #{tpu_custom_call.1} parent=11 // pred_fallthru
          _
        // Predicated region
        $region21: #{tpu_custom_call.1} parent=11 // pred_check
          %p247 = pneg %p138
        $region22: #{tpu_custom_call.1} parent=11 // pred_check_branch
          %249 = sbr.rel (%p247) target = $region24
        $region23: #{tpu_custom_call.1} parent=11 // pred_region
          _
        $region24: #{tpu_custom_call.1} parent=11 // pred_fallthru
          _
        // Predicated region
        $region25: #{tpu_custom_call.1} parent=11 // pred_check
          %p250 = pneg %p159
        $region26: #{tpu_custom_call.1} parent=11 // pred_check_branch
          %252 = sbr.rel (%p250) target = $region28
        $region27: #{tpu_custom_call.1} parent=11 // pred_region
          _
        $region28: #{tpu_custom_call.1} parent=11 // pred_fallthru
          _
        // Predicated region
        $region29: #{tpu_custom_call.1} parent=11 // pred_check
          %p253 = pneg %p180
        $region30: #{tpu_custom_call.1} parent=11 // pred_check_branch
          %255 = sbr.rel (%p253) target = $region32
        $region31: #{tpu_custom_call.1} parent=11 // pred_region
          _
        $region32: #{tpu_custom_call.1} parent=11 // pred_fallthru
          _
      $region12: #{tpu_custom_call.1} parent=5 // pred_fallthru
        _
      %p256 = scmp.lt.s32.totalorder %s23, 2
      // Predicated region
      $region33: #{tpu_custom_call.1} parent=5 // pred_check
        %p257 = pneg %p256
      $region34: #{tpu_custom_call.1} parent=5 // pred_check_branch
        %259 = sbr.rel (%p257) target = $region36
      $region35: #{tpu_custom_call.1} parent=5 // pred_region
        // Predicated region
        $region37: #{tpu_custom_call.1} parent=35 // pred_check
          %p260 = pneg %p43
        $region38: #{tpu_custom_call.1} parent=35 // pred_check_branch
          %262 = sbr.rel (%p260) target = $region40
        $region39: #{tpu_custom_call.1} parent=35 // pred_region
          %s263 = sand.u32 %s33, 1
          %s264 = scalar_lea.sflag [#allocation3], %s263
          %s265 = sand.u32 %s33, 1
          %s266 = smul.addr %s265, 16
          %s267 = scalar_lea.vmem [#allocation2], %s266
          %s268 = smul.u32 2, %s23
          %s269 = ssub.s32 3, %s268
          %p270 = scmp.lt.s32.totalorder %s269, 2
          %s271 = scalar_select %p270, %s269, 2
          %s272 = smul.u32 128, %s271
          %s274 = ssub.s32 256, %s272
          %275 = vsyncadd %s264, %s274
          %p276 = scmp.ne.s32.totalorder 0, %s272
          %s277 = smul.addr %s268, 128
          %s278 = scalar_lea.hbm %s0, %s277
          %s279 = smul.u32 8, %s271
          %s280 = sshll.u32 %s267, 4
          %s281 = int_to_ptr.vmem [resolvable:$true] %s280
          %s282 = sshll.u32 %s279, 4
          %286 = dma.hbm_to_vmem [thread:$0]  (%p276), %s278, %s282, %s281, %s264, 128, 128, 8
        $region40: #{tpu_custom_call.1} parent=35 // pred_fallthru
          _
        // Predicated region
        $region41: #{tpu_custom_call.1} parent=35 // pred_check
          %p287 = pneg %p69
        $region42: #{tpu_custom_call.1} parent=35 // pred_check_branch
          %289 = sbr.rel (%p287) target = $region44
        $region43: #{tpu_custom_call.1} parent=35 // pred_region
          %s290 = sand.u32 %s23, 1
          %s291 = scalar_lea.sflag [#allocation6], %s290
          %s292 = sand.u32 %s59, 1
          %s293 = smul.addr %s292, 16
          %s294 = scalar_lea.vmem [#allocation5], %s293
          %s295 = smul.u32 2, %s23
          %s296 = ssub.s32 3, %s295
          %p297 = scmp.lt.s32.totalorder %s296, 2
          %s298 = scalar_select %p297, %s296, 2
          %s299 = smul.u32 128, %s298
          %s301 = ssub.s32 256, %s299
          %302 = vsyncadd %s291, %s301
          %p303 = scmp.ne.s32.totalorder 0, %s299
          %s304 = smul.addr %s295, 128
          %s305 = scalar_lea.hbm %s1, %s304
          %s306 = smul.u32 8, %s298
          %s307 = sshll.u32 %s294, 4
          %s308 = int_to_ptr.vmem [resolvable:$true] %s307
          %s309 = sshll.u32 %s306, 4
          %313 = dma.hbm_to_vmem [thread:$0]  (%p303), %s305, %s309, %s308, %s291, 128, 128, 8
        $region44: #{tpu_custom_call.1} parent=35 // pred_fallthru
          _
      $region36: #{tpu_custom_call.1} parent=5 // pred_fallthru
        _
      %p314 = scmp.le.s32.totalorder 1, %s23
      %p315 = scmp.lt.s32.totalorder %s23, 3
      %p316 = pnand %p314, %p315
      %p317 = pneg %p316
      // Predicated region
      $region45: #{tpu_custom_call.1} parent=5 // pred_check
        _
      $region46: #{tpu_custom_call.1} parent=5 // pred_check_branch
        %319 = sbr.rel (%p316) target = $region48
      $region47: #{tpu_custom_call.1} parent=5 // pred_region
        %s320 = ssub.s32 %s23, 1
        %s321 = sand.u32 %s36, 1
        %s322 = scalar_lea.sflag [#allocation3], %s321
        %s323 = sand.u32 %s36, 1
        %s324 = smul.addr %s323, 16
        %s325 = scalar_lea.vmem [#allocation2], %s324
        // Predicated region
        $region49: #{tpu_custom_call.1} parent=47 // pred_check
          %p326 = pneg %p49
        $region50: #{tpu_custom_call.1} parent=47 // pred_check_branch
          %328 = sbr.rel (%p326) target = $region52
        $region51: #{tpu_custom_call.1} parent=47 // pred_region
          %329 = dma.done %s322, 256
        $region52: #{tpu_custom_call.1} parent=47 // pred_fallthru
          _
        %s330 = sand.u32 %s28, 1
        %s331 = scalar_lea.sflag [#allocation6], %s330
        %s332 = sand.u32 %s62, 1
        %s333 = smul.addr %s332, 16
        %s334 = scalar_lea.vmem [#allocation5], %s333
        // Predicated region
        $region53: #{tpu_custom_call.1} parent=47 // pred_check
          %p335 = pneg %p75
        $region54: #{tpu_custom_call.1} parent=47 // pred_check_branch
          %337 = sbr.rel (%p335) target = $region56
        $region55: #{tpu_custom_call.1} parent=47 // pred_region
          %338 = dma.done %s331, 256
        $region56: #{tpu_custom_call.1} parent=47 // pred_fallthru
          _
        // Predicated region
        $region57: #{tpu_custom_call.1} parent=47 // pred_check
          %p339 = pneg %p96
        $region58: #{tpu_custom_call.1} parent=47 // pred_check_branch
          %341 = sbr.rel (%p339) target = $region60
        $region59: #{tpu_custom_call.1} parent=47 // pred_region
          %342 = dma.done [#allocation6], 2048
        $region60: #{tpu_custom_call.1} parent=47 // pred_fallthru
          _
        // Predicated region
        $region61: #{tpu_custom_call.1} parent=47 // pred_check
          %p343 = pneg %p117
        $region62: #{tpu_custom_call.1} parent=47 // pred_check_branch
          %345 = sbr.rel (%p343) target = $region64
        $region63: #{tpu_custom_call.1} parent=47 // pred_region
          %346 = dma.done [#allocation9], 3072
        $region64: #{tpu_custom_call.1} parent=47 // pred_fallthru
          _
        %s347 = sand.u32 %s36, 1
        %s348 = scalar_lea.sflag [#allocation3], %s347
        %s349 = sand.u32 %s36, 1
        %s350 = smul.addr %s349, 16
        %s351 = scalar_lea.vmem [#allocation2], %s350
        %p352 = pneg %p49
        %p353 = pneg %p46
        %s354 = sand.u32 %s28, 1
        %s355 = scalar_lea.sflag [#allocation6], %s354
        %s356 = sand.u32 %s62, 1
        %s357 = smul.addr %s356, 16
        %s358 = scalar_lea.vmem [#allocation5], %s357
        %p359 = pneg %p75
        %p360 = pneg %p72
        %p361 = pneg %p96
        %p362 = pneg %p93
        %p363 = pneg %p117
        %p364 = pneg %p114
        %p365 = pneg %p138
        %p366 = pneg %p135
        %p367 = pneg %p159
        %p368 = pneg %p156
        %p369 = pneg %p180
        %p370 = pneg %p177
        %p371 = pneg %p206
        %p372 = pneg %p203
        %s373 = sand.u32 %s193, 1
        %s374 = scalar_lea.sflag [#allocation4], %s373
        %s375 = sand.u32 %s193, 1
        %s376 = smul.addr %s375, 16
        %s377 = scalar_lea.vmem [#allocation10], %s376
        %s378 = smul.u32 2, %s28
        %s379 = ssub.s32 3, %s378
        %p380 = scmp.lt.s32.totalorder %s379, 2
        %s381 = scalar_select %p380, %s379, 2
        %s382 = smul.u32 128, %s381
        %s383 = smul.u32 2, %s28
        %s384 = ssub.s32 3, %s383
        %p385 = scmp.lt.s32.totalorder %s384, 2
        %s386 = scalar_select %p385, %s384, 2
        %s387 = smul.u32 128, %s386
        %s388 = smul.u32 2, %s28
        %s389 = ssub.s32 3, %s388
        %p390 = scmp.lt.s32.totalorder %s389, 2
        %s391 = scalar_select %p390, %s389, 2
        %s392 = smul.u32 128, %s391
        %v393 = vld [vmem:[%s325] sm:$0xff]
        %v394 = vld [vmem:[%s325 + $0x8] sm:$0xff]
        %v395 = vld [vmem:[%s334] sm:$0xff]
        %v396 = vld [vmem:[%s334 + $0x8] sm:$0xff]
        %v397 = vld [vmem:[#allocation7] sm:$0xff]
        %v398 = vld [vmem:[#allocation7 + $0x8] sm:$0xff]
        %v399 = vld [vmem:[#allocation7 + $0x10] sm:$0xff]
        %v400 = vld [vmem:[#allocation7 + $0x18] sm:$0xff]
        %v401 = vld [vmem:[#allocation7 + $0x20] sm:$0xff]
        %v402 = vld [vmem:[#allocation7 + $0x28] sm:$0xff]
        %v403 = vld [vmem:[#allocation7 + $0x30] sm:$0xff]
        %v404 = vld [vmem:[#allocation7 + $0x38] sm:$0xff]
        %v405 = vld [vmem:[#allocation7 + $0x40] sm:$0xff]
        %v406 = vld [vmem:[#allocation7 + $0x48] sm:$0xff]
        %v407 = vld [vmem:[#allocation7 + $0x50] sm:$0xff]
        %v408 = vld [vmem:[#allocation7 + $0x58] sm:$0xff]
        %v409 = vld [vmem:[#allocation7 + $0x60] sm:$0xff]
        %v410 = vld [vmem:[#allocation7 + $0x68] sm:$0xff]
        %v411 = vld [vmem:[#allocation7 + $0x70] sm:$0xff]
        %v412 = vld [vmem:[#allocation7 + $0x78] sm:$0xff]
        %v413 = vld [vmem:[#allocation8] sm:$0xff]
        %v414 = vld [vmem:[#allocation8 + $0x8] sm:$0xff]
        %v415 = vld [vmem:[#allocation8 + $0x10] sm:$0xff]
        %v416 = vld [vmem:[#allocation8 + $0x18] sm:$0xff]
        %v417 = vld [vmem:[#allocation8 + $0x20] sm:$0xff]
        %v418 = vld [vmem:[#allocation8 + $0x28] sm:$0xff]
        %v419 = vld [vmem:[#allocation8 + $0x30] sm:$0xff]
        %v420 = vld [vmem:[#allocation8 + $0x38] sm:$0xff]
        %v421 = vld [vmem:[#allocation8 + $0x40] sm:$0xff]
        %v422 = vld [vmem:[#allocation8 + $0x48] sm:$0xff]
        %v423 = vld [vmem:[#allocation8 + $0x50] sm:$0xff]
        %v424 = vld [vmem:[#allocation8 + $0x58] sm:$0xff]
        %v425 = vld [vmem:[#allocation8 + $0x60] sm:$0xff]
        %v426 = vld [vmem:[#allocation8 + $0x68] sm:$0xff]
        %v427 = vld [vmem:[#allocation8 + $0x70] sm:$0xff]
        %v428 = vld [vmem:[#allocation8 + $0x78] sm:$0xff]
        %v429 = vld [vmem:[#allocation8 + $0x80] sm:$0xff]
        %v430 = vld [vmem:[#allocation8 + $0x88] sm:$0xff]
        %v431 = vld [vmem:[#allocation8 + $0x90] sm:$0xff]
        %v432 = vld [vmem:[#allocation8 + $0x98] sm:$0xff]
        %v433 = vld [vmem:[#allocation8 + $0xa0] sm:$0xff]
        %v434 = vld [vmem:[#allocation8 + $0xa8] sm:$0xff]
        %v435 = vld [vmem:[#allocation8 + $0xb0] sm:$0xff]
        %v436 = vld [vmem:[#allocation8 + $0xb8] sm:$0xff]
        %vm437 = vcmask 392192
        %v439 = vsel %vm437, %v395, 0
        %v442 = vsel %vm437, %v396, 0
        %444 = vmatprep.subr.mxu0 %v414
        %445 = vmatpush1.msra.mxu0 %v413
        %446 = vmatprep.subr.mxu0 %v418
        %447 = vmatpush1.msra.mxu0 %v417
        %448 = vmatprep.subr.mxu0 %v422
        %449 = vmatpush1.msra.mxu0 %v421
        %450 = vmatprep.subr.mxu0 %v426
        %451 = vmatpush1.msra.mxu0 %v425
        %452 = vmatprep.subr.mxu0 %v430
        %453 = vmatpush1.msra.mxu0 %v429
        %454 = vmatprep.subr.mxu0 %v434
        %455 = vmatpush1.msra.mxu0 %v433
        %456 = vmatprep.subr.mxu0 0.0
        %457 = vmatpush1.msra.mxu0 0.0
        %458 = vmatprep.subr.mxu0 0.0
        %459 = vmatpush1.msra.mxu0 0.0
        %460 = vmatprep.subr.mxu0 0.0
        %461 = vmatpush1.msra.mxu0 0.0
        %462 = vmatprep.subr.mxu0 0.0
        %463 = vmatpush1.msra.mxu0 0.0
        %464 = vmatprep.subr.mxu0 0.0
        %465 = vmatpush1.msra.mxu0 0.0
        %466 = vmatprep.subr.mxu0 0.0
        %467 = vmatpush1.msra.mxu0 0.0
        %468 = vmatprep.subr.mxu0 0.0
        %469 = vmatpush1.msra.mxu0 0.0
        %470 = vmatprep.subr.mxu0 0.0
        %471 = vmatpush1.msra.mxu0 0.0
        %472 = vmatprep.subr.mxu0 0.0
        %473 = vmatpush1.msra.mxu0 0.0
        %474 = vmatprep.subr.mxu0 0.0
        %475 = vmatpush1.msra.mxu0 0.0
        %476 = vmatprep.subr.mxu0 0.0
        %477 = vmatpush1.msra.mxu0 0.0
        %478 = vmatprep.subr.mxu0 0.0
        %479 = vmatpush1.msra.mxu0 0.0
        %480 = vmatprep.subr.mxu0 0.0
        %481 = vmatpush1.msra.mxu0 0.0
        %482 = vmatprep.subr.mxu0 0.0
        %483 = vmatpush1.msra.mxu0 0.0
        %484 = vmatprep.subr.mxu0 0.0
        %485 = vmatpush1.msra.mxu0 0.0
        %486 = vmatprep.subr.mxu0 0.0
        %487 = vmatpush1.msra.mxu0 0.0
        %488 = vmatprep.subr.mxu0 0.0
        %489 = vmatpush1.msra.mxu0 0.0
        %490 = vmatprep.subr.mxu0 0.0
        %491 = vmatpush1.msra.mxu0 0.0
        %492 = vmatprep.subr.mxu0 0.0
        %493 = vmatpush1.msra.mxu0 0.0
        %494 = vmatprep.subr.mxu0 0.0
        %495 = vmatpush1.msra.mxu0 0.0
        %496 = vmatprep.subr.mxu0 0.0
        %497 = vmatpush1.msra.mxu0 0.0
        %498 = vmatprep.subr.mxu0 0.0
        %499 = vmatpush1.msra.mxu0 0.0
        %500 = vmatprep.subr.mxu0 0.0
        %501 = vmatpush1.msra.mxu0 0.0
        %502 = vmatprep.subr.mxu0 0.0
        %503 = vmatpush1.msra.mxu0 0.0
        %504 = vmatprep.subr.mxu0 0.0
        %505 = vmatpush1.msra.mxu0 0.0
        %506 = vmatprep.subr.mxu0 0.0
        %507 = vmatpush1.msra.mxu0 0.0
        %508 = vmatprep.mubr.f32.mxu0 0.0
        %509 = vmatmul.mubr.f32.gmra.mrb[0].mxu0 %v439
        %v510 = vpop.f32.mrb[0].mxu0
        %v511 = vadd.f32 0.0, %v510
        %v512 = vpop.f32.mrb[0].mxu0
        %v513 = vadd.f32 0.0, %v512
        %514 = vmatprep.mubr.f32.mxu0 0.0
        %515 = vmatmul.mubr.f32.gmra.mrb[0].mxu0 %v442
        %v516 = vpop.f32.mrb[0].mxu0
        %v517 = vadd.f32 0.0, %v516
        %v518 = vpop.f32.mrb[0].mxu0
        %v519 = vadd.f32 0.0, %v518
        %520 = vdwg.mxu0
        %521 = vmatprep.subr.mxu0 %v416
        %522 = vmatpush1.msra.mxu0 %v415
        %523 = vmatprep.subr.mxu0 %v420
        %524 = vmatpush1.msra.mxu0 %v419
        %525 = vmatprep.subr.mxu0 %v424
        %526 = vmatpush1.msra.mxu0 %v423
        %527 = vmatprep.subr.mxu0 %v428
        %528 = vmatpush1.msra.mxu0 %v427
        %529 = vmatprep.subr.mxu0 %v432
        %530 = vmatpush1.msra.mxu0 %v431
        %531 = vmatprep.subr.mxu0 %v436
        %532 = vmatpush1.msra.mxu0 %v435
        %533 = vmatprep.subr.mxu0 0.0
        %534 = vmatpush1.msra.mxu0 0.0
        %535 = vmatprep.subr.mxu0 0.0
        %536 = vmatpush1.msra.mxu0 0.0
        %537 = vmatprep.subr.mxu0 0.0
        %538 = vmatpush1.msra.mxu0 0.0
        %539 = vmatprep.subr.mxu0 0.0
        %540 = vmatpush1.msra.mxu0 0.0
        %541 = vmatprep.subr.mxu0 0.0
        %542 = vmatpush1.msra.mxu0 0.0
        %543 = vmatprep.subr.mxu0 0.0
        %544 = vmatpush1.msra.mxu0 0.0
        %545 = vmatprep.subr.mxu0 0.0
        %546 = vmatpush1.msra.mxu0 0.0
        %547 = vmatprep.subr.mxu0 0.0
        %548 = vmatpush1.msra.mxu0 0.0
        %549 = vmatprep.subr.mxu0 0.0
        %550 = vmatpush1.msra.mxu0 0.0
        %551 = vmatprep.subr.mxu0 0.0
        %552 = vmatpush1.msra.mxu0 0.0
        %553 = vmatprep.subr.mxu0 0.0
        %554 = vmatpush1.msra.mxu0 0.0
        %555 = vmatprep.subr.mxu0 0.0
        %556 = vmatpush1.msra.mxu0 0.0
        %557 = vmatprep.subr.mxu0 0.0
        %558 = vmatpush1.msra.mxu0 0.0
        %559 = vmatprep.subr.mxu0 0.0
        %560 = vmatpush1.msra.mxu0 0.0
        %561 = vmatprep.subr.mxu0 0.0
        %562 = vmatpush1.msra.mxu0 0.0
        %563 = vmatprep.subr.mxu0 0.0
        %564 = vmatpush1.msra.mxu0 0.0
        %565 = vmatprep.subr.mxu0 0.0
        %566 = vmatpush1.msra.mxu0 0.0
        %567 = vmatprep.subr.mxu0 0.0
        %568 = vmatpush1.msra.mxu0 0.0
        %569 = vmatprep.subr.mxu0 0.0
        %570 = vmatpush1.msra.mxu0 0.0
        %571 = vmatprep.subr.mxu0 0.0
        %572 = vmatpush1.msra.mxu0 0.0
        %573 = vmatprep.subr.mxu0 0.0
        %574 = vmatpush1.msra.mxu0 0.0
        %575 = vmatprep.subr.mxu0 0.0
        %576 = vmatpush1.msra.mxu0 0.0
        %577 = vmatprep.subr.mxu0 0.0
        %578 = vmatpush1.msra.mxu0 0.0
        %579 = vmatprep.subr.mxu0 0.0
        %580 = vmatpush1.msra.mxu0 0.0
        %581 = vmatprep.subr.mxu0 0.0
        %582 = vmatpush1.msra.mxu0 0.0
        %583 = vmatprep.subr.mxu0 0.0
        %584 = vmatpush1.msra.mxu0 0.0
        %585 = vmatprep.mubr.f32.mxu0 0.0
        %586 = vmatmul.mubr.f32.gmra.mrb[0].mxu0 %v439
        %v587 = vpop.f32.mrb[0].mxu0
        %v588 = vadd.f32 0.0, %v587
        %v589 = vpop.f32.mrb[0].mxu0
        %v590 = vadd.f32 0.0, %v589
        %591 = vmatprep.mubr.f32.mxu0 0.0
        %592 = vmatmul.mubr.f32.gmra.mrb[0].mxu0 %v442
        %v593 = vpop.f32.mrb[0].mxu0
        %v594 = vadd.f32 0.0, %v593
        %v595 = vpop.f32.mrb[0].mxu0
        %v596 = vadd.f32 0.0, %v595
        %597 = vdwg.mxu0
        %vm598 = vcmask 261120
        %v600 = vsel %vm598, %v393, 0
        %v603 = vsel %vm598, %v394, 0
        %605 = vmatprep.subr.mxu0 %v398
        %606 = vmatpush1.msra.mxu0 %v397
        %607 = vmatprep.subr.mxu0 %v402
        %608 = vmatpush1.msra.mxu0 %v401
        %609 = vmatprep.subr.mxu0 %v406
        %610 = vmatpush1.msra.mxu0 %v405
        %611 = vmatprep.subr.mxu0 %v410
        %612 = vmatpush1.msra.mxu0 %v409
        %613 = vmatprep.subr.mxu0 0.0
        %614 = vmatpush1.msra.mxu0 0.0
        %615 = vmatprep.subr.mxu0 0.0
        %616 = vmatpush1.msra.mxu0 0.0
        %617 = vmatprep.subr.mxu0 0.0
        %618 = vmatpush1.msra.mxu0 0.0
        %619 = vmatprep.subr.mxu0 0.0
        %620 = vmatpush1.msra.mxu0 0.0
        %621 = vmatprep.subr.mxu0 0.0
        %622 = vmatpush1.msra.mxu0 0.0
        %623 = vmatprep.subr.mxu0 0.0
        %624 = vmatpush1.msra.mxu0 0.0
        %625 = vmatprep.subr.mxu0 0.0
        %626 = vmatpush1.msra.mxu0 0.0
        %627 = vmatprep.subr.mxu0 0.0
        %628 = vmatpush1.msra.mxu0 0.0
        %629 = vmatprep.subr.mxu0 0.0
        %630 = vmatpush1.msra.mxu0 0.0
        %631 = vmatprep.subr.mxu0 0.0
        %632 = vmatpush1.msra.mxu0 0.0
        %633 = vmatprep.subr.mxu0 0.0
        %634 = vmatpush1.msra.mxu0 0.0
        %635 = vmatprep.subr.mxu0 0.0
        %636 = vmatpush1.msra.mxu0 0.0
        %637 = vmatprep.subr.mxu0 0.0
        %638 = vmatpush1.msra.mxu0 0.0
        %639 = vmatprep.subr.mxu0 0.0
        %640 = vmatpush1.msra.mxu0 0.0
        %641 = vmatprep.subr.mxu0 0.0
        %642 = vmatpush1.msra.mxu0 0.0
        %643 = vmatprep.subr.mxu0 0.0
        %644 = vmatpush1.msra.mxu0 0.0
        %645 = vmatprep.subr.mxu0 0.0
        %646 = vmatpush1.msra.mxu0 0.0
        %647 = vmatprep.subr.mxu0 0.0
        %648 = vmatpush1.msra.mxu0 0.0
        %649 = vmatprep.subr.mxu0 0.0
        %650 = vmatpush1.msra.mxu0 0.0
        %651 = vmatprep.subr.mxu0 0.0
        %652 = vmatpush1.msra.mxu0 0.0
        %653 = vmatprep.subr.mxu0 0.0
        %654 = vmatpush1.msra.mxu0 0.0
        %655 = vmatprep.subr.mxu0 0.0
        %656 = vmatpush1.msra.mxu0 0.0
        %657 = vmatprep.subr.mxu0 0.0
        %658 = vmatpush1.msra.mxu0 0.0
        %659 = vmatprep.subr.mxu0 0.0
        %660 = vmatpush1.msra.mxu0 0.0
        %661 = vmatprep.subr.mxu0 0.0
        %662 = vmatpush1.msra.mxu0 0.0
        %663 = vmatprep.subr.mxu0 0.0
        %664 = vmatpush1.msra.mxu0 0.0
        %665 = vmatprep.subr.mxu0 0.0
        %666 = vmatpush1.msra.mxu0 0.0
        %667 = vmatprep.subr.mxu0 0.0
        %668 = vmatpush1.msra.mxu0 0.0
        %669 = vmatprep.mubr.f32.mxu0 0.0
        %670 = vmatmul.mubr.f32.gmra.mrb[0].mxu0 %v600
        %v671 = vpop.f32.mrb[0].mxu0
        %v672 = vadd.f32 %v511, %v671
        %v673 = vpop.f32.mrb[0].mxu0
        %v674 = vadd.f32 %v513, %v673
        %675 = vmatprep.mubr.f32.mxu0 0.0
        %676 = vmatmul.mubr.f32.gmra.mrb[0].mxu0 %v603
        %v677 = vpop.f32.mrb[0].mxu0
        %v678 = vadd.f32 %v517, %v677
        %v679 = vpop.f32.mrb[0].mxu0
        %v680 = vadd.f32 %v519, %v679
        %681 = vdwg.mxu0
        %682 = vmatprep.subr.mxu0 %v400
        %683 = vmatpush1.msra.mxu0 %v399
        %684 = vmatprep.subr.mxu0 %v404
        %685 = vmatpush1.msra.mxu0 %v403
        %686 = vmatprep.subr.mxu0 %v408
        %687 = vmatpush1.msra.mxu0 %v407
        %688 = vmatprep.subr.mxu0 %v412
        %689 = vmatpush1.msra.mxu0 %v411
        %690 = vmatprep.subr.mxu0 0.0
        %691 = vmatpush1.msra.mxu0 0.0
        %692 = vmatprep.subr.mxu0 0.0
        %693 = vmatpush1.msra.mxu0 0.0
        %694 = vmatprep.subr.mxu0 0.0
        %695 = vmatpush1.msra.mxu0 0.0
        %696 = vmatprep.subr.mxu0 0.0
        %697 = vmatpush1.msra.mxu0 0.0
        %698 = vmatprep.subr.mxu0 0.0
        %699 = vmatpush1.msra.mxu0 0.0
        %700 = vmatprep.subr.mxu0 0.0
        %701 = vmatpush1.msra.mxu0 0.0
        %702 = vmatprep.subr.mxu0 0.0
        %703 = vmatpush1.msra.mxu0 0.0
        %704 = vmatprep.subr.mxu0 0.0
        %705 = vmatpush1.msra.mxu0 0.0
        %706 = vmatprep.subr.mxu0 0.0
        %707 = vmatpush1.msra.mxu0 0.0
        %708 = vmatprep.subr.mxu0 0.0
        %709 = vmatpush1.msra.mxu0 0.0
        %710 = vmatprep.subr.mxu0 0.0
        %711 = vmatpush1.msra.mxu0 0.0
        %712 = vmatprep.subr.mxu0 0.0
        %713 = vmatpush1.msra.mxu0 0.0
        %714 = vmatprep.subr.mxu0 0.0
        %715 = vmatpush1.msra.mxu0 0.0
        %716 = vmatprep.subr.mxu0 0.0
        %717 = vmatpush1.msra.mxu0 0.0
        %718 = vmatprep.subr.mxu0 0.0
        %719 = vmatpush1.msra.mxu0 0.0
        %720 = vmatprep.subr.mxu0 0.0
        %721 = vmatpush1.msra.mxu0 0.0
        %722 = vmatprep.subr.mxu0 0.0
        %723 = vmatpush1.msra.mxu0 0.0
        %724 = vmatprep.subr.mxu0 0.0
        %725 = vmatpush1.msra.mxu0 0.0
        %726 = vmatprep.subr.mxu0 0.0
        %727 = vmatpush1.msra.mxu0 0.0
        %728 = vmatprep.subr.mxu0 0.0
        %729 = vmatpush1.msra.mxu0 0.0
        %730 = vmatprep.subr.mxu0 0.0
        %731 = vmatpush1.msra.mxu0 0.0
        %732 = vmatprep.subr.mxu0 0.0
        %733 = vmatpush1.msra.mxu0 0.0
        %734 = vmatprep.subr.mxu0 0.0
        %735 = vmatpush1.msra.mxu0 0.0
        %736 = vmatprep.subr.mxu0 0.0
        %737 = vmatpush1.msra.mxu0 0.0
        %738 = vmatprep.subr.mxu0 0.0
        %739 = vmatpush1.msra.mxu0 0.0
        %740 = vmatprep.subr.mxu0 0.0
        %741 = vmatpush1.msra.mxu0 0.0
        %742 = vmatprep.subr.mxu0 0.0
        %743 = vmatpush1.msra.mxu0 0.0
        %744 = vmatprep.subr.mxu0 0.0
        %745 = vmatpush1.msra.mxu0 0.0
        %746 = vmatprep.mubr.f32.mxu0 0.0
        %747 = vmatmul.mubr.f32.gmra.mrb[0].mxu0 %v600
        %v748 = vpop.f32.mrb[0].mxu0
        %v749 = vadd.f32 %v588, %v748
        %v750 = vpop.f32.mrb[0].mxu0
        %v751 = vadd.f32 %v590, %v750
        %752 = vmatprep.mubr.f32.mxu0 0.0
        %753 = vmatmul.mubr.f32.gmra.mrb[0].mxu0 %v603
        %v754 = vpop.f32.mrb[0].mxu0
        %v755 = vadd.f32 %v594, %v754
        %v756 = vpop.f32.mrb[0].mxu0
        %v757 = vadd.f32 %v596, %v756
        %758 = vdwg.mxu0
        %v759 = vld [vmem:[%s4] sm:$0xf]
        %v761 = vlaneseq
        %v762 = vshrl.u32 %v761, 7
        %v763 = vsub.s32 0, %v762
        %v764 = vrot.slane %v759, %v763
        %v765 = vlaneseq
        %v766 = vshrl.u32 %v765, 7
        %v767 = vsub.s32 1, %v766
        %v768 = vrot.slane %v759, %v767
        %v769 = vlaneseq
        %v770 = vshrl.u32 %v769, 7
        %v771 = vsub.s32 2, %v770
        %v772 = vrot.slane %v759, %v771
        %v773 = vlaneseq
        %v774 = vshrl.u32 %v773, 7
        %v775 = vsub.s32 3, %v774
        %v776 = vrot.slane %v759, %v775
        %v781 = vadd.f32 %v672, %v764
        %v782 = vadd.f32 %v674, %v768
        %v783 = vadd.f32 %v749, %v772
        %v784 = vadd.f32 %v751, %v776
        %v785 = vadd.f32 %v678, %v764
        %v786 = vadd.f32 %v680, %v768
        %v787 = vadd.f32 %v755, %v772
        %v788 = vadd.f32 %v757, %v776
        %v789 = vxor.u32 %v781, 2147483648
        %v790 = vxor.u32 %v782, 2147483648
        %v791 = vxor.u32 %v785, 2147483648
        %v792 = vxor.u32 %v786, 2147483648
        %v793 = vmul.f32 %v789, 1.442695
        %v794 = vpow.pop %v793
        %v795 = vmul.f32 %v790, 1.442695
        %v796 = vpow.pop %v795
        %v797 = vmul.f32 %v791, 1.442695
        %v798 = vpow.pop %v797
        %v799 = vmul.f32 %v792, 1.442695
        %v800 = vpow.pop %v799
        %v801 = vadd.f32 %v794, 1.0
        %v802 = vadd.f32 %v796, 1.0
        %v803 = vadd.f32 %v798, 1.0
        %v804 = vadd.f32 %v800, 1.0
        %v805 = vrcp.pop %v801
        %v806 = vmul.f32 1.0, %v805
        %v807 = vrcp.pop %v802
        %v808 = vmul.f32 1.0, %v807
        %v809 = vrcp.pop %v803
        %v810 = vmul.f32 1.0, %v809
        %v811 = vrcp.pop %v804
        %v812 = vmul.f32 1.0, %v811
        %v813 = vmul.f32 %v806, %v784
        %v814 = vmul.f32 %v810, %v788
        %v815 = vadd.f32 %v783, %v813
        %v816 = vadd.f32 %v787, %v814
        %v817 = vtanh.pop %v815
        %v818 = vtanh.pop %v816
        %v819 = vsub.f32 %v393, %v817
        %v820 = vsub.f32 %v394, %v818
        %v821 = vmul.f32 %v808, %v819
        %v822 = vmul.f32 %v812, %v820
        %v823 = vadd.f32 %v817, %v821
        %v824 = vadd.f32 %v818, %v822
        %v825 = vsel %vm598, %v823, 0.0
        %826 = vadd.xlane.f32.xlu0 %v825
        %v827 = vpop.xlane.xlu0 %826
        %v828 = vsel %vm598, %v824, 0.0
        %829 = vadd.xlane.f32.xlu0 %v828
        %v830 = vpop.xlane.xlu0 %829
        %v831 = vmul.f32 %v823, %v823
        %v832 = vmul.f32 %v824, %v824
        %v833 = vsel %vm598, %v831, 0.0
        %834 = vadd.xlane.f32.xlu0 %v833
        %v835 = vpop.xlane.xlu0 %834
        %v836 = vsel %vm598, %v832, 0.0
        %837 = vadd.xlane.f32.xlu0 %v836
        %v838 = vpop.xlane.xlu0 %837
        %v839 = vmul.f32 %v827, 0.03125
        %v840 = vmul.f32 %v830, 0.03125
        %v841 = vmul.f32 %v835, 0.03125
        %v842 = vmul.f32 %v838, 0.03125
        %v843 = vmul.f32 %v839, %v839
        %v844 = vmul.f32 %v840, %v840
        %v845 = vsub.f32 %v841, %v843
        %v846 = vsub.f32 %v842, %v844
        %v847 = vmax.f32 %v845, 0.0
        %v848 = vmax.f32 %v846, 0.0
        %v849 = vsub.f32 %v823, %v839
        %v850 = vsub.f32 %v824, %v840
        %v851 = vadd.f32 %v847, 1e-05
        %v852 = vadd.f32 %v848, 1e-05
        %v853 = vrsqrt.pop %v851
        %v854 = vrsqrt.pop %v852
        %v855 = vmul.f32 %v849, %v853
        %v856 = vmul.f32 %v850, %v854
        %v857 = vld [vmem:[%s5] sm:$0x1]
        %v859 = vlaneseq
        %v860 = vshrl.u32 %v859, 7
        %v861 = vsub.s32 0, %v860
        %v862 = vrot.slane %v857, %v861
        %v864 = vmul.f32 %v855, %v862
        %v865 = vmul.f32 %v856, %v862
        %v866 = vld [vmem:[%s6] sm:$0x1]
        %v868 = vlaneseq
        %v869 = vshrl.u32 %v868, 7
        %v870 = vsub.s32 0, %v869
        %v871 = vrot.slane %v866, %v870
        %v873 = vadd.f32 %v864, %v871
        %v874 = vadd.f32 %v865, %v871
        %875 = vst.msk [vmem:[%s377] sm:$0xff] %vm598, %v873
        %876 = vst.msk [vmem:[%s377 + $0x8] sm:$0xff] %vm598, %v874
        %s877 = sand.u32 %s193, 1
        %s878 = scalar_lea.sflag [#allocation4], %s877
        %s879 = sand.u32 %s193, 1
        %s880 = smul.addr %s879, 16
        %s881 = scalar_lea.vmem [#allocation10], %s880
        // Predicated region
        $region65: #{tpu_custom_call.1} parent=47 // pred_check
          %p882 = pneg %p203
        $region66: #{tpu_custom_call.1} parent=47 // pred_check_branch
          %884 = sbr.rel (%p882) target = $region68
        $region67: #{tpu_custom_call.1} parent=47 // pred_region
          %s885 = smul.u32 2, %s28
          %s886 = ssub.s32 3, %s885
          %p887 = scmp.lt.s32.totalorder %s886, 2
          %s888 = scalar_select %p887, %s886, 2
          %s889 = smul.u32 128, %s888
          %s891 = ssub.s32 256, %s889
          %892 = vsyncadd %s878, %s891
          %p893 = scmp.ne.s32.totalorder 0, %s889
          %s894 = smul.addr %s885, 128
          %s895 = scalar_lea.hbm %s7, %s894
          %s896 = smul.u32 8, %s888
          %s897 = sshll.u32 %s881, 4
          %s898 = int_to_ptr.vmem [resolvable:$true] %s897
          %s899 = sshll.u32 %s896, 4
          %903 = dma.vmem_to_hbm [thread:$0]  (%p893), %s898, %s899, %s895, %s878, 128, 128, 8
        $region68: #{tpu_custom_call.1} parent=47 // pred_fallthru
          _
      $region48: #{tpu_custom_call.1} parent=5 // pred_fallthru
        _
      %p904 = scmp.le.s32.totalorder 2, %s23
      // Predicated region
      $region69: #{tpu_custom_call.1} parent=5 // pred_check
        %p905 = pneg %p904
      $region70: #{tpu_custom_call.1} parent=5 // pred_check_branch
        %907 = sbr.rel (%p905) target = $region72
      $region71: #{tpu_custom_call.1} parent=5 // pred_region
        %s908 = ssub.s32 %s23, 2
        // Predicated region
        $region73: #{tpu_custom_call.1} parent=71 // pred_check
          %p909 = pneg %p209
        $region74: #{tpu_custom_call.1} parent=71 // pred_check_branch
          %911 = sbr.rel (%p909) target = $region76
        $region75: #{tpu_custom_call.1} parent=71 // pred_region
          %s912 = sand.u32 %s194, 1
          %s913 = scalar_lea.sflag [#allocation4], %s912
          %s914 = sand.u32 %s194, 1
          %s915 = smul.addr %s914, 16
          %s916 = scalar_lea.vmem [#allocation10], %s915
          %917 = dma.done %s913, 256
        $region76: #{tpu_custom_call.1} parent=71 // pred_fallthru
          _
      $region72: #{tpu_custom_call.1} parent=5 // pred_fallthru
        _
    $region6: #{tpu_custom_call.1} parent=1 // loop_footer
      %s27 = sadd.s32 1, %s23
    $region7: #{tpu_custom_call.1} parent=1 // loop_footer_branch
      %22 = sbr.rel target = $region3
    $region8: #{tpu_custom_call.1} parent=1 // loop_exit
      _
    %918 = vsyncpa [#allocation3], 1
    %s919 = scalar_lea.sflag [#allocation3], 1
    %920 = vsyncpa %s919, 1
    %921 = vsyncpa [#allocation6], 1
    %s922 = scalar_lea.sflag [#allocation6], 1
    %923 = vsyncpa %s922, 1
    %924 = vsyncpa [#allocation9], 1
    %925 = vsyncpa [#allocation4], 1
    %s926 = scalar_lea.sflag [#allocation4], 1
    %927 = vsyncpa %s926, 1

</llo_original>
